<compile_context>
chip_gen: v7x
topology: tpu7x:2x2x1
jax: 0.10.0
libtpu: 0.0.40
codegen_flags: <defaults>
</compile_context>

<pallas_src>
import jax
import jax.numpy as jnp
import numpy as np
from jax import lax
from jax.experimental import pallas as pl
from jax.experimental.pallas import tpu as pltpu


def _round_up(x, m):
    return (x + m - 1) // m * m


def _pick_tile(n, d, itemsize, per_buffer_bytes, max_tile=256):
    """Largest multiple-of-8 tile (<= max_tile) whose (tile, d) block fits budget."""
    row_bytes = max(1, d * itemsize)
    cap = max(8, (per_buffer_bytes // row_bytes) // 8 * 8)
    return max(8, min(max_tile, cap, _round_up(n, 8)))


# ---------------------------------------------------------------------------
# Path A: small vocab — VMEM-resident table, one-hot gather on the MXU.
# ---------------------------------------------------------------------------
def _onehot_matmul_kernel(ids_ref, w_ref, out_ref):
    # ids_ref: VMEM (tile_n, 1) int32   -- token ids for this tile
    # w_ref:   VMEM (V, D)              -- full table, resident (constant block)
    # out_ref: VMEM (tile_n, D)
    tile_n = out_ref.shape[0]
    v = w_ref.shape[0]
    ids = ids_ref[...]                                       # (tile_n, 1)
    iota = lax.broadcasted_iota(jnp.int32, (tile_n, v), 1)   # (tile_n, V)
    one_hot = (iota == ids).astype(w_ref.dtype)
    out_ref[...] = jnp.dot(
        one_hot,
        w_ref[...],
        preferred_element_type=jnp.float32,
        precision=lax.Precision.HIGHEST,
    ).astype(out_ref.dtype)


# ---------------------------------------------------------------------------
# Path B: large vocab — table stays in HBM, one row DMA per token,
# unrolled issue loop + single aggregate wait.
# ---------------------------------------------------------------------------
def _gather_dma_kernel(ids_ref, w_hbm, out_ref, sem):
    # ids_ref: SMEM (n_pad,) int32      -- flattened, clamped ids (prefetched)
    # w_hbm:   HBM  (V, D)              -- full embedding table (never copied whole)
    # out_ref: VMEM (tile_n, D)         -- gathered rows for this tile
    # sem:     DMA semaphore array (1,)
    tile_n = out_ref.shape[0]
    base = pl.program_id(0) * tile_n

    def issue(j, carry):
        row = ids_ref[base + j]
        pltpu.make_async_copy(
            w_hbm.at[pl.ds(row, 1), :],
            out_ref.at[pl.ds(j, 1), :],
            sem.at[0],
        ).start()
        return carry

    # Unrolled descriptor-issue loop: lets the scheduler pack scalar slots
    # against the single vector-misc (DMA descriptor) slot.
    lax.fori_loop(0, tile_n, issue, 0, unroll=8)

    # Single aggregate wait: the semaphore accumulates bytes from all tile_n
    # row copies; a descriptor covering the whole (tile_n, D) block has
    # exactly that byte count (standard paged-attention wait pattern).
    pltpu.make_async_copy(out_ref, out_ref, sem.at[0]).wait()


# ---------------------------------------------------------------------------
# Wrapper: equivalent of CustomEmbedding.forward / to_embeddings.
# ---------------------------------------------------------------------------
def custom_embedding_forward(indices, weight, *, onehot_max_vocab=1024):
    """indices: (seq_len, batch_size) int; weight: (V, D).
    Returns (seq_len, batch_size, D) in weight.dtype."""
    seq_len, batch = indices.shape
    v, d = weight.shape
    n = seq_len * batch
    itemsize = jnp.dtype(weight.dtype).itemsize

    # Flatten ids, clamp to valid rows (jnp.take-style; torch would raise).
    ids_flat = jnp.clip(indices.reshape(n).astype(jnp.int32), 0, v - 1)

    # Small-vocab one-hot MXU path only when the table comfortably fits VMEM.
    use_onehot = (v <= onehot_max_vocab) and (v * d * itemsize <= 4 * 1024 * 1024)

    per_buffer = (2 << 20) if use_onehot else (4 << 20)
    tile_n = _pick_tile(n, d, itemsize, per_buffer)

    n_pad = _round_up(n, tile_n)
    if n_pad != n:
        ids_flat = jnp.pad(ids_flat, (0, n_pad - n))  # pad with id 0 (valid row)
    grid = (n_pad // tile_n,)

    cparams = pltpu.CompilerParams(
        dimension_semantics=("parallel",),
        vmem_limit_bytes=32 * 1024 * 1024,
    )

    if use_onehot:
        out = pl.pallas_call(
            _onehot_matmul_kernel,
            out_shape=jax.ShapeDtypeStruct((n_pad, d), weight.dtype),
            grid=grid,
            in_specs=[
                pl.BlockSpec((tile_n, 1), lambda i: (i, 0)),   # ids tile
                pl.BlockSpec((v, d), lambda i: (0, 0)),        # resident table
            ],
            out_specs=pl.BlockSpec((tile_n, d), lambda i: (i, 0)),
            compiler_params=cparams,
        )(ids_flat.reshape(n_pad, 1), weight)
    else:
        out = pl.pallas_call(
            _gather_dma_kernel,
            out_shape=jax.ShapeDtypeStruct((n_pad, d), weight.dtype),
            grid_spec=pltpu.PrefetchScalarGridSpec(
                num_scalar_prefetch=1,                         # ids -> SMEM
                grid=grid,
                in_specs=[pl.BlockSpec(memory_space=pl.ANY)],  # table stays in HBM
                out_specs=pl.BlockSpec((tile_n, d), lambda i, ids: (i, 0)),
                scratch_shapes=[pltpu.SemaphoreType.DMA((1,))],
            ),
            compiler_params=cparams,
        )(ids_flat, weight)

    if n_pad != n:
        out = out[:n]
    return out.reshape(seq_len, batch, d)


def init_embedding_weight(key, num_embeddings, embedding_dim, padding_idx=None):
    """Matches CustomEmbedding.reset_parameters: N(0, 1) init, zero padding row."""
    w = jax.random.normal(key, (num_embeddings, embedding_dim), dtype=jnp.float32)
    if padding_idx is not None:
        if padding_idx < 0:
            padding_idx = num_embeddings + padding_idx
        w = w.at[padding_idx].set(0.0)
    return w
    # TODO(synk): gradient-hook bookkeeping (requires_emb_grad / save_grad) and
    # padding_idx zero-gradient training semantics have no forward-pass
    # equivalent and are omitted.


if __name__ == "__main__":
    key = jax.random.PRNGKey(0)
    k_w, k_idx, k_w2, k_idx2 = jax.random.split(key, 4)

    seq_len, batch_size = 8, 2

    # Case 1: small vocab (one-hot MXU fast path).
    num_embeddings, embedding_dim = 32, 128
    weight = init_embedding_weight(k_w, num_embeddings, embedding_dim)
    indices = jax.random.randint(
        k_idx, (seq_len, batch_size), 0, num_embeddings, dtype=jnp.int32
    )
    out = jax.block_until_ready(custom_embedding_forward(indices, weight))
    ref = jnp.take(weight, indices.reshape(-1), axis=0).reshape(
        seq_len, batch_size, embedding_dim
    )
    assert out.shape == (seq_len, batch_size, embedding_dim)
    np.testing.assert_allclose(np.asarray(out), np.asarray(ref), rtol=1e-6, atol=1e-6)

    # Case 2: large vocab (per-row HBM DMA gather path).
    big_vocab = 4096
    weight2 = jax.random.normal(k_w2, (big_vocab, embedding_dim), dtype=jnp.float32)
    indices2 = jax.random.randint(
        k_idx2, (seq_len, batch_size), 0, big_vocab, dtype=jnp.int32
    )
    out2 = jax.block_until_ready(custom_embedding_forward(indices2, weight2))
    ref2 = jnp.take(weight2, indices2.reshape(-1), axis=0).reshape(
        seq_len, batch_size, embedding_dim
    )
    assert out2.shape == (seq_len, batch_size, embedding_dim)
    np.testing.assert_allclose(np.asarray(out2), np.asarray(ref2), rtol=1e-6, atol=1e-6)

    print("KERNEL_OK")
</pallas_src>

<mosaic_0001>
module attributes {stable_mosaic.version = 11 : i64} {
  func.func @_onehot_matmul_kernel(%arg0: i32, %arg1: memref<16x1xi32, #tpu.memory_space<vmem>>, %arg2: memref<32x128xf32, #tpu.memory_space<vmem>>, %arg3: memref<16x128xf32, #tpu.memory_space<vmem>>) attributes {dimension_semantics = [#tpu.dimension_semantics<parallel>], iteration_bounds = array<i64: 1>, scalar_prefetch = 0 : i64, scratch_operands = 0 : i64, tpu.core_type = #tpu.core_type<tc>, window_params = [{transform_indices = @transform_0, window_bounds = array<i64: 16, 1>}, {pipeline_mode = #tpu.pipeline_mode<synchronous>, transform_indices = @transform_1, window_bounds = array<i64: 32, 128>}, {transform_indices = @transform_2, window_bounds = array<i64: 16, 128>}]} {
    %c0 = arith.constant 0 : index
    %c0_0 = arith.constant 0 : index
    %0 = vector.load %arg1[%c0, %c0_0] : memref<16x1xi32, #tpu.memory_space<vmem>>, vector<16x1xi32>
    %1 = tpu.iota {dimensions = array<i32: 1>} : vector<16x32xi32>
    %2 = vector.broadcast %0 : vector<16x1xi32> to vector<16x32xi32>
    %3 = arith.cmpi eq, %1, %2 : vector<16x32xi32>
    %4 = arith.extui %3 : vector<16x32xi1> to vector<16x32xi32>
    %5 = arith.sitofp %4 : vector<16x32xi32> to vector<16x32xf32>
    %c0_1 = arith.constant 0 : index
    %c0_2 = arith.constant 0 : index
    %6 = vector.load %arg2[%c0_1, %c0_2] : memref<32x128xf32, #tpu.memory_space<vmem>>, vector<32x128xf32>
    %cst = arith.constant dense<0.000000e+00> : vector<16x128xf32>
    %7 = tpu.matmul %5, %6, %cst {dimension_numbers = #tpu.dot_dimension_numbers<[1], [0], [0], [1], [0, 0, 1, 1], [], []>, precision = #tpu.contract_precision<fp32>} : vector<16x32xf32>, vector<32x128xf32>, vector<16x128xf32> -> vector<16x128xf32>
    %c0_3 = arith.constant 0 : index
    %c0_4 = arith.constant 0 : index
    %8 = vector.load %arg3[%c0_3, %c0_4] : memref<16x128xf32, #tpu.memory_space<vmem>>, vector<16x128xf32>
    tpu.vector_store %arg3[%c0_3, %c0_4], %7 {strides = array<i32>} : memref<16x128xf32, #tpu.memory_space<vmem>>, vector<16x128xf32>,
    return
  }
  func.func @transform_0(%arg0: i32) -> (i32, i32) {
    %c0_i32 = arith.constant 0 : i32
    %c0_i32_0 = arith.constant 0 : i32
    return %arg0, %c0_i32 : i32, i32
  }
  func.func @transform_1(%arg0: i32) -> (i32, i32) {
    %c0_i32 = arith.constant 0 : i32
    %c0_i32_0 = arith.constant 0 : i32
    %c0_i32_1 = arith.constant 0 : i32
    return %c0_i32, %c0_i32_0 : i32, i32
  }
  func.func @transform_2(%arg0: i32) -> (i32, i32) {
    %c0_i32 = arith.constant 0 : i32
    %c0_i32_0 = arith.constant 0 : i32
    return %arg0, %c0_i32 : i32, i32
  }
}

</mosaic_0001>

<llo_original>
// kernel: tpu_custom_call.1
$region0: #{tpu_custom_call.1}
  #allocation0 [shape = 'u32[]', space=smem, size = 0x4, offset = 0x4, fixed_abs, tag = 'smem constant byte address 0x4 - core index']
  #allocation1 [shape = 'u32[144,128]{1,0:T(1,128)}', space=vmem, size = 0x12000, scoped, tag = 'internal scratch']
  %s0 = inlined_call_operand.vmem [shape: s32[16,1], index: 0, kind: input, shape index: {}]
  %s1 = inlined_call_operand.hbm [shape: f32[32,128], index: 1, kind: input, shape index: {}]
  %s2 = inlined_call_operand.hbm [shape: f32[16,128], index: 2, kind: output, shape index: {}]
  %s3 = sld [smem:[#allocation0]]
  $region22: #{tpu_custom_call.1} parent=0
    _
  %s5 = ssub.s32 1, %s3
  %s6 = scalar_select 0, %s5, %s3
  $region1: #{tpu_custom_call.1} parent=0
    #allocation2 [shape = 'u8[16384]{0}', space=vmem, size = 0x4000, scoped, tag = 'input window, operand 1, single buffered']
    #allocation3 [shape = 's32[1]{0}', space=sflag, size = 0x4, scoped, tag = 'scoped memory for tpu_custom_call.1']
    #allocation4 [shape = 's32[1]{0}', space=sflag, size = 0x4, scoped, tag = 'scoped memory for tpu_custom_call.1']
    #allocation5 [shape = 'u8[8192]{0}', space=vmem, size = 0x2000, scoped, tag = 'output window, operand 0, single buffered']
    %7 = vsyncpa [#allocation3], 0
    %8 = vsyncpa [#allocation4], 0
    // Predicated region
    $region2: #{tpu_custom_call.1} parent=1 // pred_check
      _
    $region3: #{tpu_custom_call.1} parent=1 // pred_check_branch
      %10 = sbr.rel (0) target = $region5
    $region4: #{tpu_custom_call.1} parent=1 // pred_region
      _
    $region5: #{tpu_custom_call.1} parent=1 // pred_fallthru
      _
    // Predicated region
    $region6: #{tpu_custom_call.1} parent=1 // pred_check
      _
    $region7: #{tpu_custom_call.1} parent=1 // pred_check_branch
      %12 = sbr.rel (0) target = $region9
    $region8: #{tpu_custom_call.1} parent=1 // pred_region
      %s14 = ssub.s32 512, 512
      %15 = vsyncadd [#allocation3], %s14
      %s16 = sshll.u32 [#allocation2], 4
      %s17 = int_to_ptr.vmem [resolvable:$true] %s16
      %22 = dma.hbm_to_vmem [thread:$0]  %s1, 512, %s17, [#allocation3], 128, 128, 8
    $region9: #{tpu_custom_call.1} parent=1 // pred_fallthru
      _
    // Predicated region
    $region10: #{tpu_custom_call.1} parent=1 // pred_check
      _
    $region11: #{tpu_custom_call.1} parent=1 // pred_check_branch
      %24 = sbr.rel (0) target = $region13
    $region12: #{tpu_custom_call.1} parent=1 // pred_region
      %25 = dma.done [#allocation3], 512
    $region13: #{tpu_custom_call.1} parent=1 // pred_fallthru
      _
    %v26 = vld [vmem:[%s0] sm:$0xff]
    %v27 = vld [vmem:[%s0 + $0x8] sm:$0xff]
    %v28 = vlaneseq
    %v29 = vand.u32 %v28, 127
    %30 = vset.pattern.permute.xlu0 0
    %31 = vperm.xlu0 %30, %v26
    %v32 = vpop.permute.xlu0 %31
    %33 = vset.pattern.permute.xlu0 0
    %34 = vperm.xlu0 %33, %v27
    %v35 = vpop.permute.xlu0 %34
    %vm36 = vcmp.eq.s32.totalorder %v29, %v32
    %vm37 = vcmp.eq.s32.totalorder %v29, %v35
    %v38 = vsel %vm36, 1, 0
    %v39 = vsel %vm37, 1, 0
    %v40 = vcvt.s32.f32 %v38
    %v41 = vcvt.s32.f32 %v39
    %v42 = vld [vmem:[#allocation2] sm:$0xff]
    %v43 = vld [vmem:[#allocation2 + $0x8] sm:$0xff]
    %v44 = vld [vmem:[#allocation2 + $0x10] sm:$0xff]
    %v45 = vld [vmem:[#allocation2 + $0x18] sm:$0xff]
    %vm46 = vcmask 261120
    %v48 = vsel %vm46, %v40, 0
    %v51 = vsel %vm46, %v41, 0
    %53 = vmatprep.subr.mxu0 0.0
    %v54 = vand.u32 %v42, 4294901760
    %55 = vmatpush1.msra.mxu0 %v54
    %56 = vmatprep.subr.mxu0 0.0
    %v57 = vand.u32 %v43, 4294901760
    %58 = vmatpush1.msra.mxu0 %v57
    %59 = vmatprep.subr.mxu0 0.0
    %v60 = vand.u32 %v44, 4294901760
    %61 = vmatpush1.msra.mxu0 %v60
    %62 = vmatprep.subr.mxu0 0.0
    %v63 = vand.u32 %v45, 4294901760
    %64 = vmatpush1.msra.mxu0 %v63
    %65 = vmatprep.subr.mxu0 0.0
    %66 = vmatpush1.msra.mxu0 0.0
    %67 = vmatprep.subr.mxu0 0.0
    %68 = vmatpush1.msra.mxu0 0.0
    %69 = vmatprep.subr.mxu0 0.0
    %70 = vmatpush1.msra.mxu0 0.0
    %71 = vmatprep.subr.mxu0 0.0
    %72 = vmatpush1.msra.mxu0 0.0
    %73 = vmatprep.subr.mxu0 0.0
    %74 = vmatpush1.msra.mxu0 0.0
    %75 = vmatprep.subr.mxu0 0.0
    %76 = vmatpush1.msra.mxu0 0.0
    %77 = vmatprep.subr.mxu0 0.0
    %78 = vmatpush1.msra.mxu0 0.0
    %79 = vmatprep.subr.mxu0 0.0
    %80 = vmatpush1.msra.mxu0 0.0
    %81 = vmatprep.subr.mxu0 0.0
    %82 = vmatpush1.msra.mxu0 0.0
    %83 = vmatprep.subr.mxu0 0.0
    %84 = vmatpush1.msra.mxu0 0.0
    %85 = vmatprep.subr.mxu0 0.0
    %86 = vmatpush1.msra.mxu0 0.0
    %87 = vmatprep.subr.mxu0 0.0
    %88 = vmatpush1.msra.mxu0 0.0
    %89 = vmatprep.subr.mxu0 0.0
    %90 = vmatpush1.msra.mxu0 0.0
    %91 = vmatprep.subr.mxu0 0.0
    %92 = vmatpush1.msra.mxu0 0.0
    %93 = vmatprep.subr.mxu0 0.0
    %94 = vmatpush1.msra.mxu0 0.0
    %95 = vmatprep.subr.mxu0 0.0
    %96 = vmatpush1.msra.mxu0 0.0
    %97 = vmatprep.subr.mxu0 0.0
    %98 = vmatpush1.msra.mxu0 0.0
    %99 = vmatprep.subr.mxu0 0.0
    %100 = vmatpush1.msra.mxu0 0.0
    %101 = vmatprep.subr.mxu0 0.0
    %102 = vmatpush1.msra.mxu0 0.0
    %103 = vmatprep.subr.mxu0 0.0
    %104 = vmatpush1.msra.mxu0 0.0
    %105 = vmatprep.subr.mxu0 0.0
    %106 = vmatpush1.msra.mxu0 0.0
    %107 = vmatprep.subr.mxu0 0.0
    %108 = vmatpush1.msra.mxu0 0.0
    %109 = vmatprep.subr.mxu0 0.0
    %110 = vmatpush1.msra.mxu0 0.0
    %111 = vmatprep.subr.mxu0 0.0
    %112 = vmatpush1.msra.mxu0 0.0
    %113 = vmatprep.subr.mxu0 0.0
    %114 = vmatpush1.msra.mxu0 0.0
    %115 = vmatprep.subr.mxu0 0.0
    %116 = vmatpush1.msra.mxu0 0.0
    %117 = vmatprep.subr.mxu0 0.0
    %118 = vmatpush1.msra.mxu0 0.0
    %119 = vmatprep.subr.mxu0 0.0
    %120 = vmatpush1.msra.mxu0 0.0
    %121 = vmatprep.mubr.f32.mxu0 0.0
    %v122 = vand.u32 %v48, 4294901760
    %v123 = vsub.f32 %v48, %v122
    %v124 = vand.u32 %v123, 4294901760
    %v125 = vsub.f32 %v123, %v124
    %v126 = vand.u32 %v125, 4294901760
    %127 = vmatmul.mubr.f32.gmra.mrb[0].mxu0 %v126
    %v128 = vpop.f32.mrb[0].mxu0
    %v129 = vadd.f32 0.0, %v128
    %v130 = vpop.f32.mrb[0].mxu0
    %131 = vmatprep.mubr.f32.mxu0 0.0
    %v132 = vand.u32 %v51, 4294901760
    %v133 = vsub.f32 %v51, %v132
    %v134 = vand.u32 %v133, 4294901760
    %v135 = vsub.f32 %v133, %v134
    %v136 = vand.u32 %v135, 4294901760
    %137 = vmatmul.mubr.f32.gmra.mrb[0].mxu0 %v136
    %v138 = vpop.f32.mrb[0].mxu0
    %v139 = vadd.f32 0.0, %v138
    %v140 = vpop.f32.mrb[0].mxu0
    %141 = vdwg.mxu0
    %142 = vmatprep.subr.mxu0 0.0
    %v143 = vand.u32 %v42, 4294901760
    %v144 = vsub.f32 %v42, %v143
    %v145 = vand.u32 %v144, 4294901760
    %v146 = vsub.f32 %v144, %v145
    %v147 = vand.u32 %v146, 4294901760
    %148 = vmatpush1.msra.mxu0 %v147
    %149 = vmatprep.subr.mxu0 0.0
    %v150 = vand.u32 %v43, 4294901760
    %v151 = vsub.f32 %v43, %v150
    %v152 = vand.u32 %v151, 4294901760
    %v153 = vsub.f32 %v151, %v152
    %v154 = vand.u32 %v153, 4294901760
    %155 = vmatpush1.msra.mxu0 %v154
    %156 = vmatprep.subr.mxu0 0.0
    %v157 = vand.u32 %v44, 4294901760
    %v158 = vsub.f32 %v44, %v157
    %v159 = vand.u32 %v158, 4294901760
    %v160 = vsub.f32 %v158, %v159
    %v161 = vand.u32 %v160, 4294901760
    %162 = vmatpush1.msra.mxu0 %v161
    %163 = vmatprep.subr.mxu0 0.0
    %v164 = vand.u32 %v45, 4294901760
    %v165 = vsub.f32 %v45, %v164
    %v166 = vand.u32 %v165, 4294901760
    %v167 = vsub.f32 %v165, %v166
    %v168 = vand.u32 %v167, 4294901760
    %169 = vmatpush1.msra.mxu0 %v168
    %170 = vmatprep.subr.mxu0 0.0
    %171 = vmatpush1.msra.mxu0 0.0
    %172 = vmatprep.subr.mxu0 0.0
    %173 = vmatpush1.msra.mxu0 0.0
    %174 = vmatprep.subr.mxu0 0.0
    %175 = vmatpush1.msra.mxu0 0.0
    %176 = vmatprep.subr.mxu0 0.0
    %177 = vmatpush1.msra.mxu0 0.0
    %178 = vmatprep.subr.mxu0 0.0
    %179 = vmatpush1.msra.mxu0 0.0
    %180 = vmatprep.subr.mxu0 0.0
    %181 = vmatpush1.msra.mxu0 0.0
    %182 = vmatprep.subr.mxu0 0.0
    %183 = vmatpush1.msra.mxu0 0.0
    %184 = vmatprep.subr.mxu0 0.0
    %185 = vmatpush1.msra.mxu0 0.0
    %186 = vmatprep.subr.mxu0 0.0
    %187 = vmatpush1.msra.mxu0 0.0
    %188 = vmatprep.subr.mxu0 0.0
    %189 = vmatpush1.msra.mxu0 0.0
    %190 = vmatprep.subr.mxu0 0.0
    %191 = vmatpush1.msra.mxu0 0.0
    %192 = vmatprep.subr.mxu0 0.0
    %193 = vmatpush1.msra.mxu0 0.0
    %194 = vmatprep.subr.mxu0 0.0
    %195 = vmatpush1.msra.mxu0 0.0
    %196 = vmatprep.subr.mxu0 0.0
    %197 = vmatpush1.msra.mxu0 0.0
    %198 = vmatprep.subr.mxu0 0.0
    %199 = vmatpush1.msra.mxu0 0.0
    %200 = vmatprep.subr.mxu0 0.0
    %201 = vmatpush1.msra.mxu0 0.0
    %202 = vmatprep.subr.mxu0 0.0
    %203 = vmatpush1.msra.mxu0 0.0
    %204 = vmatprep.subr.mxu0 0.0
    %205 = vmatpush1.msra.mxu0 0.0
    %206 = vmatprep.subr.mxu0 0.0
    %207 = vmatpush1.msra.mxu0 0.0
    %208 = vmatprep.subr.mxu0 0.0
    %209 = vmatpush1.msra.mxu0 0.0
    %210 = vmatprep.subr.mxu0 0.0
    %211 = vmatpush1.msra.mxu0 0.0
    %212 = vmatprep.subr.mxu0 0.0
    %213 = vmatpush1.msra.mxu0 0.0
    %214 = vmatprep.subr.mxu0 0.0
    %215 = vmatpush1.msra.mxu0 0.0
    %216 = vmatprep.subr.mxu0 0.0
    %217 = vmatpush1.msra.mxu0 0.0
    %218 = vmatprep.subr.mxu0 0.0
    %219 = vmatpush1.msra.mxu0 0.0
    %220 = vmatprep.subr.mxu0 0.0
    %221 = vmatpush1.msra.mxu0 0.0
    %222 = vmatprep.subr.mxu0 0.0
    %223 = vmatpush1.msra.mxu0 0.0
    %224 = vmatprep.subr.mxu0 0.0
    %225 = vmatpush1.msra.mxu0 0.0
    %226 = vmatprep.mubr.f32.mxu0 0.0
    %v227 = vand.u32 %v48, 4294901760
    %228 = vmatmul.mubr.f32.gmra.mrb[0].mxu0 %v227
    %v229 = vpop.f32.mrb[0].mxu0
    %v230 = vadd.f32 %v129, %v229
    %v231 = vpop.f32.mrb[0].mxu0
    %232 = vmatprep.mubr.f32.mxu0 0.0
    %v233 = vand.u32 %v51, 4294901760
    %234 = vmatmul.mubr.f32.gmra.mrb[0].mxu0 %v233
    %v235 = vpop.f32.mrb[0].mxu0
    %v236 = vadd.f32 %v139, %v235
    %v237 = vpop.f32.mrb[0].mxu0
    %238 = vdwg.mxu0
    %239 = vmatprep.subr.mxu0 0.0
    %v240 = vand.u32 %v42, 4294901760
    %v241 = vsub.f32 %v42, %v240
    %242 = vmatpush1.msra.mxu0 %v241
    %243 = vmatprep.subr.mxu0 0.0
    %v244 = vand.u32 %v43, 4294901760
    %v245 = vsub.f32 %v43, %v244
    %246 = vmatpush1.msra.mxu0 %v245
    %247 = vmatprep.subr.mxu0 0.0
    %v248 = vand.u32 %v44, 4294901760
    %v249 = vsub.f32 %v44, %v248
    %250 = vmatpush1.msra.mxu0 %v249
    %251 = vmatprep.subr.mxu0 0.0
    %v252 = vand.u32 %v45, 4294901760
    %v253 = vsub.f32 %v45, %v252
    %254 = vmatpush1.msra.mxu0 %v253
    %255 = vmatprep.subr.mxu0 0.0
    %256 = vmatpush1.msra.mxu0 0.0
    %257 = vmatprep.subr.mxu0 0.0
    %258 = vmatpush1.msra.mxu0 0.0
    %259 = vmatprep.subr.mxu0 0.0
    %260 = vmatpush1.msra.mxu0 0.0
    %261 = vmatprep.subr.mxu0 0.0
    %262 = vmatpush1.msra.mxu0 0.0
    %263 = vmatprep.subr.mxu0 0.0
    %264 = vmatpush1.msra.mxu0 0.0
    %265 = vmatprep.subr.mxu0 0.0
    %266 = vmatpush1.msra.mxu0 0.0
    %267 = vmatprep.subr.mxu0 0.0
    %268 = vmatpush1.msra.mxu0 0.0
    %269 = vmatprep.subr.mxu0 0.0
    %270 = vmatpush1.msra.mxu0 0.0
    %271 = vmatprep.subr.mxu0 0.0
    %272 = vmatpush1.msra.mxu0 0.0
    %273 = vmatprep.subr.mxu0 0.0
    %274 = vmatpush1.msra.mxu0 0.0
    %275 = vmatprep.subr.mxu0 0.0
    %276 = vmatpush1.msra.mxu0 0.0
    %277 = vmatprep.subr.mxu0 0.0
    %278 = vmatpush1.msra.mxu0 0.0
    %279 = vmatprep.subr.mxu0 0.0
    %280 = vmatpush1.msra.mxu0 0.0
    %281 = vmatprep.subr.mxu0 0.0
    %282 = vmatpush1.msra.mxu0 0.0
    %283 = vmatprep.subr.mxu0 0.0
    %284 = vmatpush1.msra.mxu0 0.0
    %285 = vmatprep.subr.mxu0 0.0
    %286 = vmatpush1.msra.mxu0 0.0
    %287 = vmatprep.subr.mxu0 0.0
    %288 = vmatpush1.msra.mxu0 0.0
    %289 = vmatprep.subr.mxu0 0.0
    %290 = vmatpush1.msra.mxu0 0.0
    %291 = vmatprep.subr.mxu0 0.0
    %292 = vmatpush1.msra.mxu0 0.0
    %293 = vmatprep.subr.mxu0 0.0
    %294 = vmatpush1.msra.mxu0 0.0
    %295 = vmatprep.subr.mxu0 0.0
    %296 = vmatpush1.msra.mxu0 0.0
    %297 = vmatprep.subr.mxu0 0.0
    %298 = vmatpush1.msra.mxu0 0.0
    %299 = vmatprep.subr.mxu0 0.0
    %300 = vmatpush1.msra.mxu0 0.0
    %301 = vmatprep.subr.mxu0 0.0
    %302 = vmatpush1.msra.mxu0 0.0
    %303 = vmatprep.subr.mxu0 0.0
    %304 = vmatpush1.msra.mxu0 0.0
    %305 = vmatprep.subr.mxu0 0.0
    %306 = vmatpush1.msra.mxu0 0.0
    %307 = vmatprep.subr.mxu0 0.0
    %308 = vmatpush1.msra.mxu0 0.0
    %309 = vmatprep.subr.mxu0 0.0
    %310 = vmatpush1.msra.mxu0 0.0
    %311 = vmatprep.mubr.f32.mxu0 0.0
    %v312 = vand.u32 %v48, 4294901760
    %v313 = vsub.f32 %v48, %v312
    %314 = vmatmul.mubr.f32.gmra.mrb[0].mxu0 %v313
    %v315 = vpop.f32.mrb[0].mxu0
    %v316 = vadd.f32 %v230, %v315
    %v317 = vpop.f32.mrb[0].mxu0
    %318 = vmatprep.mubr.f32.mxu0 0.0
    %v319 = vand.u32 %v51, 4294901760
    %v320 = vsub.f32 %v51, %v319
    %321 = vmatmul.mubr.f32.gmra.mrb[0].mxu0 %v320
    %v322 = vpop.f32.mrb[0].mxu0
    %v323 = vadd.f32 %v236, %v322
    %v324 = vpop.f32.mrb[0].mxu0
    %325 = vdwg.mxu0
    %326 = vmatprep.subr.mxu0 0.0
    %v327 = vand.u32 %v42, 4294901760
    %328 = vmatpush1.msra.mxu0 %v327
    %329 = vmatprep.subr.mxu0 0.0
    %v330 = vand.u32 %v43, 4294901760
    %331 = vmatpush1.msra.mxu0 %v330
    %332 = vmatprep.subr.mxu0 0.0
    %v333 = vand.u32 %v44, 4294901760
    %334 = vmatpush1.msra.mxu0 %v333
    %335 = vmatprep.subr.mxu0 0.0
    %v336 = vand.u32 %v45, 4294901760
    %337 = vmatpush1.msra.mxu0 %v336
    %338 = vmatprep.subr.mxu0 0.0
    %339 = vmatpush1.msra.mxu0 0.0
    %340 = vmatprep.subr.mxu0 0.0
    %341 = vmatpush1.msra.mxu0 0.0
    %342 = vmatprep.subr.mxu0 0.0
    %343 = vmatpush1.msra.mxu0 0.0
    %344 = vmatprep.subr.mxu0 0.0
    %345 = vmatpush1.msra.mxu0 0.0
    %346 = vmatprep.subr.mxu0 0.0
    %347 = vmatpush1.msra.mxu0 0.0
    %348 = vmatprep.subr.mxu0 0.0
    %349 = vmatpush1.msra.mxu0 0.0
    %350 = vmatprep.subr.mxu0 0.0
    %351 = vmatpush1.msra.mxu0 0.0
    %352 = vmatprep.subr.mxu0 0.0
    %353 = vmatpush1.msra.mxu0 0.0
    %354 = vmatprep.subr.mxu0 0.0
    %355 = vmatpush1.msra.mxu0 0.0
    %356 = vmatprep.subr.mxu0 0.0
    %357 = vmatpush1.msra.mxu0 0.0
    %358 = vmatprep.subr.mxu0 0.0
    %359 = vmatpush1.msra.mxu0 0.0
    %360 = vmatprep.subr.mxu0 0.0
    %361 = vmatpush1.msra.mxu0 0.0
    %362 = vmatprep.subr.mxu0 0.0
    %363 = vmatpush1.msra.mxu0 0.0
    %364 = vmatprep.subr.mxu0 0.0
    %365 = vmatpush1.msra.mxu0 0.0
    %366 = vmatprep.subr.mxu0 0.0
    %367 = vmatpush1.msra.mxu0 0.0
    %368 = vmatprep.subr.mxu0 0.0
    %369 = vmatpush1.msra.mxu0 0.0
    %370 = vmatprep.subr.mxu0 0.0
    %371 = vmatpush1.msra.mxu0 0.0
    %372 = vmatprep.subr.mxu0 0.0
    %373 = vmatpush1.msra.mxu0 0.0
    %374 = vmatprep.subr.mxu0 0.0
    %375 = vmatpush1.msra.mxu0 0.0
    %376 = vmatprep.subr.mxu0 0.0
    %377 = vmatpush1.msra.mxu0 0.0
    %378 = vmatprep.subr.mxu0 0.0
    %379 = vmatpush1.msra.mxu0 0.0
    %380 = vmatprep.subr.mxu0 0.0
    %381 = vmatpush1.msra.mxu0 0.0
    %382 = vmatprep.subr.mxu0 0.0
    %383 = vmatpush1.msra.mxu0 0.0
    %384 = vmatprep.subr.mxu0 0.0
    %385 = vmatpush1.msra.mxu0 0.0
    %386 = vmatprep.subr.mxu0 0.0
    %387 = vmatpush1.msra.mxu0 0.0
    %388 = vmatprep.subr.mxu0 0.0
    %389 = vmatpush1.msra.mxu0 0.0
    %390 = vmatprep.subr.mxu0 0.0
    %391 = vmatpush1.msra.mxu0 0.0
    %392 = vmatprep.subr.mxu0 0.0
    %393 = vmatpush1.msra.mxu0 0.0
    %394 = vmatprep.mubr.f32.mxu0 0.0
    %v395 = vand.u32 %v48, 4294901760
    %v396 = vsub.f32 %v48, %v395
    %v397 = vand.u32 %v396, 4294901760
    %398 = vmatmul.mubr.f32.gmra.mrb[0].mxu0 %v397
    %v399 = vpop.f32.mrb[0].mxu0
    %v400 = vadd.f32 %v316, %v399
    %v401 = vpop.f32.mrb[0].mxu0
    %402 = vmatprep.mubr.f32.mxu0 0.0
    %v403 = vand.u32 %v51, 4294901760
    %v404 = vsub.f32 %v51, %v403
    %v405 = vand.u32 %v404, 4294901760
    %406 = vmatmul.mubr.f32.gmra.mrb[0].mxu0 %v405
    %v407 = vpop.f32.mrb[0].mxu0
    %v408 = vadd.f32 %v323, %v407
    %v409 = vpop.f32.mrb[0].mxu0
    %410 = vdwg.mxu0
    %411 = vmatprep.subr.mxu0 0.0
    %v412 = vand.u32 %v42, 4294901760
    %v413 = vsub.f32 %v42, %v412
    %v414 = vand.u32 %v413, 4294901760
    %415 = vmatpush1.msra.mxu0 %v414
    %416 = vmatprep.subr.mxu0 0.0
    %v417 = vand.u32 %v43, 4294901760
    %v418 = vsub.f32 %v43, %v417
    %v419 = vand.u32 %v418, 4294901760
    %420 = vmatpush1.msra.mxu0 %v419
    %421 = vmatprep.subr.mxu0 0.0
    %v422 = vand.u32 %v44, 4294901760
    %v423 = vsub.f32 %v44, %v422
    %v424 = vand.u32 %v423, 4294901760
    %425 = vmatpush1.msra.mxu0 %v424
    %426 = vmatprep.subr.mxu0 0.0
    %v427 = vand.u32 %v45, 4294901760
    %v428 = vsub.f32 %v45, %v427
    %v429 = vand.u32 %v428, 4294901760
    %430 = vmatpush1.msra.mxu0 %v429
    %431 = vmatprep.subr.mxu0 0.0
    %432 = vmatpush1.msra.mxu0 0.0
    %433 = vmatprep.subr.mxu0 0.0
    %434 = vmatpush1.msra.mxu0 0.0
    %435 = vmatprep.subr.mxu0 0.0
    %436 = vmatpush1.msra.mxu0 0.0
    %437 = vmatprep.subr.mxu0 0.0
    %438 = vmatpush1.msra.mxu0 0.0
    %439 = vmatprep.subr.mxu0 0.0
    %440 = vmatpush1.msra.mxu0 0.0
    %441 = vmatprep.subr.mxu0 0.0
    %442 = vmatpush1.msra.mxu0 0.0
    %443 = vmatprep.subr.mxu0 0.0
    %444 = vmatpush1.msra.mxu0 0.0
    %445 = vmatprep.subr.mxu0 0.0
    %446 = vmatpush1.msra.mxu0 0.0
    %447 = vmatprep.subr.mxu0 0.0
    %448 = vmatpush1.msra.mxu0 0.0
    %449 = vmatprep.subr.mxu0 0.0
    %450 = vmatpush1.msra.mxu0 0.0
    %451 = vmatprep.subr.mxu0 0.0
    %452 = vmatpush1.msra.mxu0 0.0
    %453 = vmatprep.subr.mxu0 0.0
    %454 = vmatpush1.msra.mxu0 0.0
    %455 = vmatprep.subr.mxu0 0.0
    %456 = vmatpush1.msra.mxu0 0.0
    %457 = vmatprep.subr.mxu0 0.0
    %458 = vmatpush1.msra.mxu0 0.0
    %459 = vmatprep.subr.mxu0 0.0
    %460 = vmatpush1.msra.mxu0 0.0
    %461 = vmatprep.subr.mxu0 0.0
    %462 = vmatpush1.msra.mxu0 0.0
    %463 = vmatprep.subr.mxu0 0.0
    %464 = vmatpush1.msra.mxu0 0.0
    %465 = vmatprep.subr.mxu0 0.0
    %466 = vmatpush1.msra.mxu0 0.0
    %467 = vmatprep.subr.mxu0 0.0
    %468 = vmatpush1.msra.mxu0 0.0
    %469 = vmatprep.subr.mxu0 0.0
    %470 = vmatpush1.msra.mxu0 0.0
    %471 = vmatprep.subr.mxu0 0.0
    %472 = vmatpush1.msra.mxu0 0.0
    %473 = vmatprep.subr.mxu0 0.0
    %474 = vmatpush1.msra.mxu0 0.0
    %475 = vmatprep.subr.mxu0 0.0
    %476 = vmatpush1.msra.mxu0 0.0
    %477 = vmatprep.subr.mxu0 0.0
    %478 = vmatpush1.msra.mxu0 0.0
    %479 = vmatprep.subr.mxu0 0.0
    %480 = vmatpush1.msra.mxu0 0.0
    %481 = vmatprep.subr.mxu0 0.0
    %482 = vmatpush1.msra.mxu0 0.0
    %483 = vmatprep.subr.mxu0 0.0
    %484 = vmatpush1.msra.mxu0 0.0
    %485 = vmatprep.subr.mxu0 0.0
    %486 = vmatpush1.msra.mxu0 0.0
    %487 = vmatprep.mubr.f32.mxu0 0.0
    %v488 = vand.u32 %v48, 4294901760
    %489 = vmatmul.mubr.f32.gmra.mrb[0].mxu0 %v488
    %v490 = vpop.f32.mrb[0].mxu0
    %v491 = vadd.f32 %v400, %v490
    %v492 = vpop.f32.mrb[0].mxu0
    %493 = vmatprep.mubr.f32.mxu0 0.0
    %v494 = vand.u32 %v51, 4294901760
    %495 = vmatmul.mubr.f32.gmra.mrb[0].mxu0 %v494
    %v496 = vpop.f32.mrb[0].mxu0
    %v497 = vadd.f32 %v408, %v496
    %v498 = vpop.f32.mrb[0].mxu0
    %499 = vdwg.mxu0
    %500 = vmatprep.subr.mxu0 0.0
    %v501 = vand.u32 %v42, 4294901760
    %502 = vmatpush1.msra.mxu0 %v501
    %503 = vmatprep.subr.mxu0 0.0
    %v504 = vand.u32 %v43, 4294901760
    %505 = vmatpush1.msra.mxu0 %v504
    %506 = vmatprep.subr.mxu0 0.0
    %v507 = vand.u32 %v44, 4294901760
    %508 = vmatpush1.msra.mxu0 %v507
    %509 = vmatprep.subr.mxu0 0.0
    %v510 = vand.u32 %v45, 4294901760
    %511 = vmatpush1.msra.mxu0 %v510
    %512 = vmatprep.subr.mxu0 0.0
    %513 = vmatpush1.msra.mxu0 0.0
    %514 = vmatprep.subr.mxu0 0.0
    %515 = vmatpush1.msra.mxu0 0.0
    %516 = vmatprep.subr.mxu0 0.0
    %517 = vmatpush1.msra.mxu0 0.0
    %518 = vmatprep.subr.mxu0 0.0
    %519 = vmatpush1.msra.mxu0 0.0
    %520 = vmatprep.subr.mxu0 0.0
    %521 = vmatpush1.msra.mxu0 0.0
    %522 = vmatprep.subr.mxu0 0.0
    %523 = vmatpush1.msra.mxu0 0.0
    %524 = vmatprep.subr.mxu0 0.0
    %525 = vmatpush1.msra.mxu0 0.0
    %526 = vmatprep.subr.mxu0 0.0
    %527 = vmatpush1.msra.mxu0 0.0
    %528 = vmatprep.subr.mxu0 0.0
    %529 = vmatpush1.msra.mxu0 0.0
    %530 = vmatprep.subr.mxu0 0.0
    %531 = vmatpush1.msra.mxu0 0.0
    %532 = vmatprep.subr.mxu0 0.0
    %533 = vmatpush1.msra.mxu0 0.0
    %534 = vmatprep.subr.mxu0 0.0
    %535 = vmatpush1.msra.mxu0 0.0
    %536 = vmatprep.subr.mxu0 0.0
    %537 = vmatpush1.msra.mxu0 0.0
    %538 = vmatprep.subr.mxu0 0.0
    %539 = vmatpush1.msra.mxu0 0.0
    %540 = vmatprep.subr.mxu0 0.0
    %541 = vmatpush1.msra.mxu0 0.0
    %542 = vmatprep.subr.mxu0 0.0
    %543 = vmatpush1.msra.mxu0 0.0
    %544 = vmatprep.subr.mxu0 0.0
    %545 = vmatpush1.msra.mxu0 0.0
    %546 = vmatprep.subr.mxu0 0.0
    %547 = vmatpush1.msra.mxu0 0.0
    %548 = vmatprep.subr.mxu0 0.0
    %549 = vmatpush1.msra.mxu0 0.0
    %550 = vmatprep.subr.mxu0 0.0
    %551 = vmatpush1.msra.mxu0 0.0
    %552 = vmatprep.subr.mxu0 0.0
    %553 = vmatpush1.msra.mxu0 0.0
    %554 = vmatprep.subr.mxu0 0.0
    %555 = vmatpush1.msra.mxu0 0.0
    %556 = vmatprep.subr.mxu0 0.0
    %557 = vmatpush1.msra.mxu0 0.0
    %558 = vmatprep.subr.mxu0 0.0
    %559 = vmatpush1.msra.mxu0 0.0
    %560 = vmatprep.subr.mxu0 0.0
    %561 = vmatpush1.msra.mxu0 0.0
    %562 = vmatprep.subr.mxu0 0.0
    %563 = vmatpush1.msra.mxu0 0.0
    %564 = vmatprep.subr.mxu0 0.0
    %565 = vmatpush1.msra.mxu0 0.0
    %566 = vmatprep.subr.mxu0 0.0
    %567 = vmatpush1.msra.mxu0 0.0
    %568 = vmatprep.mubr.f32.mxu0 0.0
    %v569 = vand.u32 %v48, 4294901760
    %570 = vmatmul.mubr.f32.gmra.mrb[0].mxu0 %v569
    %v571 = vpop.f32.mrb[0].mxu0
    %v572 = vadd.f32 %v491, %v571
    %v573 = vpop.f32.mrb[0].mxu0
    %574 = vmatprep.mubr.f32.mxu0 0.0
    %v575 = vand.u32 %v51, 4294901760
    %576 = vmatmul.mubr.f32.gmra.mrb[0].mxu0 %v575
    %v577 = vpop.f32.mrb[0].mxu0
    %v578 = vadd.f32 %v497, %v577
    %v579 = vpop.f32.mrb[0].mxu0
    %580 = vdwg.mxu0
    %581 = vst [vmem:[#allocation5] sm:$0xff] %v572
    %582 = vst [vmem:[#allocation5 + $0x8] sm:$0xff] %v578
    // Predicated region
    $region14: #{tpu_custom_call.1} parent=1 // pred_check
      _
    $region15: #{tpu_custom_call.1} parent=1 // pred_check_branch
      %584 = sbr.rel (0) target = $region17
    $region16: #{tpu_custom_call.1} parent=1 // pred_region
      %s586 = ssub.s32 256, 256
      %587 = vsyncadd [#allocation4], %s586
      %s588 = sshll.u32 [#allocation5], 4
      %s589 = int_to_ptr.vmem [resolvable:$true] %s588
      %594 = dma.vmem_to_hbm [thread:$0]  %s589, 256, %s2, [#allocation4], 128, 128, 8
    $region17: #{tpu_custom_call.1} parent=1 // pred_fallthru
      _
    // Predicated region
    $region18: #{tpu_custom_call.1} parent=1 // pred_check
      _
    $region19: #{tpu_custom_call.1} parent=1 // pred_check_branch
      %596 = sbr.rel (0) target = $region21
    $region20: #{tpu_custom_call.1} parent=1 // pred_region
      %597 = dma.done [#allocation4], 256
    $region21: #{tpu_custom_call.1} parent=1 // pred_fallthru
      _
    %598 = vsyncpa [#allocation3], 1
    %599 = vsyncpa [#allocation4], 1

</llo_original>
